<compile_context>
chip_gen: v7x
topology: tpu7x:2x2x1
jax: 0.10.0
libtpu: 0.0.40
codegen_flags: <defaults>
</compile_context>

<pallas_src>
import jax
import jax.numpy as jnp
from jax import lax
from jax.experimental import pallas as pl
from jax.experimental.pallas import tpu as pltpu


def linear_relu_kernel(x_ref, w_ref, b_ref, o_ref, acc_ref):
    # x_ref: (tm, tk)   activations tile
    # w_ref: (tn, tk)   weight tile, still [out, in] layout -> contract on K
    # b_ref: (1, tn)    bias tile for this N block
    # o_ref: (tm, tn)   output tile
    # acc_ref: (tm, tn) f32 accumulator, resident across the K grid axis
    k = pl.program_id(2)

    @pl.when(k == 0)
    def _():
        acc_ref[...] = jnp.zeros_like(acc_ref)

    # Contract x[K] with w[K] (axis 1 of both): avoids materializing weight.T.
    acc_ref[...] += lax.dot_general(
        x_ref[...], w_ref[...],
        dimension_numbers=(((1,), (1,)), ((), ())),
        preferred_element_type=jnp.float32,
    )

    @pl.when(k == pl.num_programs(2) - 1)
    def _():
        out = acc_ref[...] + b_ref[...].astype(jnp.float32)
        o_ref[...] = jnp.maximum(out, 0.0).astype(o_ref.dtype)


def _round_up(x, m):
    return ((x + m - 1) // m) * m


def linear_layer_forward(x, weight, bias, *, tm=256, tn=256, tk=256):
    """Pallas equivalent of LinearLayer.forward (Linear + ReLU).

    x:      [B, in_features]
    weight: [out_features, in_features]   (PyTorch Linear convention, no .T)
    bias:   [out_features]
    returns [B, out_features]
    """
    B, K = x.shape
    N, K2 = weight.shape
    assert K == K2, "weight in_features must match x"
    assert bias.shape == (N,)

    # Tile sizes: tm multiple of 8, tn/tk multiples of 128 (lane-dense).
    tm = min(tm, _round_up(B, 8))
    tn = min(tn, _round_up(N, 128))
    tk = min(tk, _round_up(K, 128))

    # Pad problem to tile multiples (zeros are inert in the matmul; padded
    # output rows/cols are sliced away below).
    M_pad = _round_up(B, tm)
    N_pad = _round_up(N, tn)
    K_pad = _round_up(K, tk)

    x_p = x if (M_pad == B and K_pad == K) else jnp.pad(
        x, ((0, M_pad - B), (0, K_pad - K)))
    w_p = weight if (N_pad == N and K_pad == K) else jnp.pad(
        weight, ((0, N_pad - N), (0, K_pad - K)))
    b_p = (bias if N_pad == N else jnp.pad(bias, (0, N_pad - N))).reshape(1, N_pad)

    grid = (M_pad // tm, N_pad // tn, K_pad // tk)

    out = pl.pallas_call(
        linear_relu_kernel,
        out_shape=jax.ShapeDtypeStruct((M_pad, N_pad), x.dtype),
        grid_spec=pltpu.PrefetchScalarGridSpec(
            num_scalar_prefetch=0,
            grid=grid,
            in_specs=[
                pl.BlockSpec((tm, tk), lambda i, j, k: (i, k)),   # x
                pl.BlockSpec((tn, tk), lambda i, j, k: (j, k)),   # weight [out, in]
                pl.BlockSpec((1, tn), lambda i, j, k: (0, j)),    # bias
            ],
            out_specs=pl.BlockSpec((tm, tn), lambda i, j, k: (i, j)),
            scratch_shapes=[pltpu.VMEM((tm, tn), jnp.float32)],
        ),
        compiler_params=pltpu.CompilerParams(
            # M and N are independent -> shardable across TensorCores (v7x);
            # K is the reduction axis carried in the accumulator.
            dimension_semantics=("parallel", "parallel", "arbitrary"),
            # Tiles are a few MiB double-buffered; 32 MiB is safe on
            # v5e/v6e (128 MiB VMEM) and within v7x's 64 MiB.
            vmem_limit_bytes=32 * 1024 * 1024,
        ),
    )(x_p, w_p, b_p)

    return out[:B, :N]


def _reference(x, weight, bias):
    return jnp.maximum(x @ weight.T + bias, 0.0)


def _make_inputs(key, B, in_f, out_f):
    kx, kw, kb = jax.random.split(key, 3)
    x = jax.random.normal(kx, (B, in_f), dtype=jnp.float32)
    bound = 1.0 / (in_f ** 0.5)
    weight = jax.random.uniform(
        kw, (out_f, in_f), minval=-bound, maxval=bound, dtype=jnp.float32)
    bias = jax.random.uniform(
        kb, (out_f,), minval=-bound, maxval=bound, dtype=jnp.float32)
    return x, weight, bias


if __name__ == "__main__":
    key = jax.random.PRNGKey(0)
    k1, k2 = jax.random.split(key)

    # Case 1: multi-tile grid (exercises K accumulation and N padding 384->512).
    x, w, b = _make_inputs(k1, B=64, in_f=512, out_f=384)
    out = linear_layer_forward(x, w, b)
    jax.block_until_ready(out)
    ref = _reference(x, w, b)
    assert out.shape == ref.shape
    assert jnp.allclose(out, ref, atol=1e-4, rtol=1e-4)

    # Case 2: tiny / oddly-shaped input (exercises padding on every axis).
    x2, w2, b2 = _make_inputs(k2, B=8, in_f=32, out_f=64)
    out2 = linear_layer_forward(x2, w2, b2)
    jax.block_until_ready(out2)
    ref2 = _reference(x2, w2, b2)
    assert out2.shape == ref2.shape
    assert jnp.allclose(out2, ref2, atol=1e-5, rtol=1e-5)

    print("KERNEL_OK")
</pallas_src>

<mosaic_0001>
module attributes {stable_mosaic.version = 11 : i64} {
  func.func @linear_relu_kernel(%arg0: i32, %arg1: i32, %arg2: i32, %arg3: memref<64x256xf32, #tpu.memory_space<vmem>>, %arg4: memref<256x256xf32, #tpu.memory_space<vmem>>, %arg5: memref<1x256xf32, #tpu.memory_space<vmem>>, %arg6: memref<64x256xf32, #tpu.memory_space<vmem>>, %arg7: memref<64x256xf32, #tpu.memory_space<vmem>>) attributes {dimension_semantics = [#tpu.dimension_semantics<parallel>, #tpu.dimension_semantics<parallel>, #tpu.dimension_semantics<arbitrary>], iteration_bounds = array<i64: 1, 2, 2>, scalar_prefetch = 0 : i64, scratch_operands = 1 : i64, tpu.core_type = #tpu.core_type<tc>, window_params = [{transform_indices = @transform_0, window_bounds = array<i64: 64, 256>}, {transform_indices = @transform_1, window_bounds = array<i64: 256, 256>}, {transform_indices = @transform_2, window_bounds = array<i64: 1, 256>}, {transform_indices = @transform_3, window_bounds = array<i64: 64, 256>}]} {
    %c0_i32 = arith.constant 0 : i32
    %0 = arith.cmpi eq, %arg2, %c0_i32 : i32
    %1 = arith.extui %0 : i1 to i32
    %c0_i32_0 = arith.constant 0 : i32
    %2 = arith.cmpi ne, %1, %c0_i32_0 : i32
    scf.if %2 {
      %cst_9 = arith.constant 0.000000e+00 : f32
      %12 = vector.broadcast %cst_9 : f32 to vector<64x256xf32>
      %c0_10 = arith.constant 0 : index
      %c0_11 = arith.constant 0 : index
      %13 = vector.load %arg7[%c0_10, %c0_11] : memref<64x256xf32, #tpu.memory_space<vmem>>, vector<64x256xf32>
      tpu.vector_store %arg7[%c0_10, %c0_11], %12 {strides = array<i32>} : memref<64x256xf32, #tpu.memory_space<vmem>>, vector<64x256xf32>,
    } else {
    }
    %c0 = arith.constant 0 : index
    %c0_1 = arith.constant 0 : index
    %3 = vector.load %arg7[%c0, %c0_1] : memref<64x256xf32, #tpu.memory_space<vmem>>, vector<64x256xf32>
    %c0_2 = arith.constant 0 : index
    %c0_3 = arith.constant 0 : index
    %4 = vector.load %arg3[%c0_2, %c0_3] : memref<64x256xf32, #tpu.memory_space<vmem>>, vector<64x256xf32>
    %c0_4 = arith.constant 0 : index
    %c0_5 = arith.constant 0 : index
    %5 = vector.load %arg4[%c0_4, %c0_5] : memref<256x256xf32, #tpu.memory_space<vmem>>, vector<256x256xf32>
    %cst = arith.constant dense<0.000000e+00> : vector<64x256xf32>
    %6 = tpu.matmul %4, %5, %cst {dimension_numbers = #tpu.dot_dimension_numbers<[1], [1], [0], [0], [0, 0, 1, 0], [], []>} : vector<64x256xf32>, vector<256x256xf32>, vector<64x256xf32> -> vector<64x256xf32>
    %7 = arith.addf %3, %6 : vector<64x256xf32>
    %c0_6 = arith.constant 0 : index
    %c0_7 = arith.constant 0 : index
    %8 = vector.load %arg7[%c0_6, %c0_7] : memref<64x256xf32, #tpu.memory_space<vmem>>, vector<64x256xf32>
    tpu.vector_store %arg7[%c0_6, %c0_7], %7 {strides = array<i32>} : memref<64x256xf32, #tpu.memory_space<vmem>>, vector<64x256xf32>,
    %c1_i32 = arith.constant 1 : i32
    %9 = arith.cmpi eq, %arg2, %c1_i32 : i32
    %10 = arith.extui %9 : i1 to i32
    %c0_i32_8 = arith.constant 0 : i32
    %11 = arith.cmpi ne, %10, %c0_i32_8 : i32
    scf.if %11 {
      %c0_9 = arith.constant 0 : index
      %c0_10 = arith.constant 0 : index
      %12 = vector.load %arg7[%c0_9, %c0_10] : memref<64x256xf32, #tpu.memory_space<vmem>>, vector<64x256xf32>
      %c0_11 = arith.constant 0 : index
      %c0_12 = arith.constant 0 : index
      %13 = vector.load %arg5[%c0_11, %c0_12] : memref<1x256xf32, #tpu.memory_space<vmem>>, vector<1x256xf32>
      %14 = vector.broadcast %13 : vector<1x256xf32> to vector<64x256xf32>
      %15 = arith.addf %12, %14 : vector<64x256xf32>
      %cst_13 = arith.constant 0.000000e+00 : f32
      %16 = vector.broadcast %cst_13 : f32 to vector<64x256xf32>
      %17 = arith.maximumf %15, %16 : vector<64x256xf32>
      %c0_14 = arith.constant 0 : index
      %c0_15 = arith.constant 0 : index
      %18 = vector.load %arg6[%c0_14, %c0_15] : memref<64x256xf32, #tpu.memory_space<vmem>>, vector<64x256xf32>
      tpu.vector_store %arg6[%c0_14, %c0_15], %17 {strides = array<i32>} : memref<64x256xf32, #tpu.memory_space<vmem>>, vector<64x256xf32>,
    } else {
    }
    return
  }
  func.func @transform_0(%arg0: i32, %arg1: i32, %arg2: i32) -> (i32, i32) {
    %c0_i32 = arith.constant 0 : i32
    return %arg0, %arg2 : i32, i32
  }
  func.func @transform_1(%arg0: i32, %arg1: i32, %arg2: i32) -> (i32, i32) {
    %c0_i32 = arith.constant 0 : i32
    return %arg1, %arg2 : i32, i32
  }
  func.func @transform_2(%arg0: i32, %arg1: i32, %arg2: i32) -> (i32, i32) {
    %c0_i32 = arith.constant 0 : i32
    %c0_i32_0 = arith.constant 0 : i32
    return %c0_i32, %arg1 : i32, i32
  }
  func.func @transform_3(%arg0: i32, %arg1: i32, %arg2: i32) -> (i32, i32) {
    %c0_i32 = arith.constant 0 : i32
    return %arg0, %arg1 : i32, i32
  }
}

</mosaic_0001>

<llo_original>
// kernel: tpu_custom_call.1
$region0: #{tpu_custom_call.1}
  #allocation0 [shape = 'u32[]', space=smem, size = 0x4, offset = 0x4, fixed_abs, tag = 'smem constant byte address 0x4 - core index']
  #allocation1 [shape = 'u32[144,128]{1,0:T(1,128)}', space=vmem, size = 0x12000, scoped, tag = 'internal scratch']
  #allocation2 [shape = 'f32[64,256]{1,0:T(8,128)}', space=vmem, size = 0x10000, scoped, tag = 'scratch operand']
  %s0 = inlined_call_operand.hbm [shape: f32[64,512], index: 0, kind: input, shape index: {}]
  %s1 = inlined_call_operand.hbm [shape: f32[512,512], index: 1, kind: input, shape index: {}]
  %s2 = inlined_call_operand.vmem [shape: f32[1,512], index: 2, kind: input, shape index: {}]
  %s3 = inlined_call_operand.hbm [shape: f32[64,512], index: 3, kind: output, shape index: {}]
  %s4 = sld [smem:[#allocation0]]
  $region61: #{tpu_custom_call.1} parent=0
    _
  %s6 = ssub.s32 1, %s4
  %s7 = scalar_select 0, %s6, %s4
  $region1: #{tpu_custom_call.1} parent=0
    #allocation3 [shape = 'u8[131072]{0}', space=vmem, size = 0x20000, scoped, tag = 'input window, operand 0']
    #allocation4 [shape = 's32[2]{0}', space=sflag, size = 0x8, scoped, tag = 'scoped memory for tpu_custom_call.1']
    #allocation5 [shape = 's32[2]{0}', space=sflag, size = 0x8, scoped, tag = 'scoped memory for tpu_custom_call.1']
    #allocation6 [shape = 'u8[524288]{0}', space=vmem, size = 0x80000, scoped, tag = 'input window, operand 1']
    #allocation7 [shape = 's32[2]{0}', space=sflag, size = 0x8, scoped, tag = 'scoped memory for tpu_custom_call.1']
    #allocation8 [shape = 'u8[131072]{0}', space=vmem, size = 0x20000, scoped, tag = 'output window, operand 0']
    %8 = vsyncpa [#allocation4], 0
    %s9 = scalar_lea.sflag [#allocation4], 1
    %10 = vsyncpa %s9, 0
    %11 = vsyncpa [#allocation7], 0
    %s12 = scalar_lea.sflag [#allocation7], 1
    %13 = vsyncpa %s12, 0
    %14 = vsyncpa [#allocation5], 0
    %s15 = scalar_lea.sflag [#allocation5], 1
    %16 = vsyncpa %s15, 0
    loop: start=0, step=1, limit=6
    $region2: #{tpu_custom_call.1} parent=1 // loop_pre_header
      _
    $region3: #{tpu_custom_call.1} parent=1 // loop_header
      %s18 = sphi 0, %s22
      %p19 = scmp.ge.s32.totalorder %s18, 6
      %s25 = sphi 0, %s44
      %s26 = sphi 0, %s40
      %s27 = sphi 0, %s36
      %s28 = sphi 0, %s25
      %s29 = sphi 0, %s26
      %s30 = sphi 0, %s27
      %s31 = sphi 0, %s28
      %s32 = sphi 0, %s29
      %s33 = sphi 0, %s30
      %s49 = sphi 0, %s51
      %s52 = sphi 0, %s49
      %s53 = sphi 0, %s52
      %s69 = sphi 0, %s53
      %s77 = sphi 0, %s79
      %s80 = sphi 0, %s77
      %s81 = sphi 0, %s80
      %s97 = sphi 0, %s81
      %s103 = sphi 0, %s105
      %s106 = sphi 0, %s103
      %s107 = sphi 0, %s106
      %s123 = sphi 0, %s107
      %s131 = sphi 0, %s133
      %s134 = sphi 0, %s131
      %s135 = sphi 0, %s134
      %s151 = sphi 0, %s135
    $region4: #{tpu_custom_call.1} parent=1 // loop_header_branch
      %21 = sbr.rel (%p19) target = $region8
    $region5: #{tpu_custom_call.1} parent=1 // loop_body
      %s23 = ssub.s32 %s18, 1
      %s24 = ssub.s32 %s18, 2
      %s34 = sadd.s32 1, %s27
      %p35 = scmp.ge.s32.totalorder %s34, 2
      %s36 = scalar_select %p35, 0, %s34
      %s37 = sadd.s32 1, %s26
      %s38 = scalar_select %p35, %s37, %s26
      %p39 = scmp.ge.s32.totalorder %s38, 2
      %s40 = scalar_select %p39, 0, %s38
      %s41 = sadd.s32 1, %s25
      %s42 = scalar_select %p39, %s41, %s25
      %p43 = scmp.ge.s32.totalorder %s42, 1
      %s44 = scalar_select %p43, 0, %s42
      %s45 = ssub.s32 %s25, %s44
      %s46 = ssub.s32 %s27, %s36
      %s47 = sor.u32 %s45, %s46
      %p48 = scmp.eq.s32.totalorder %s47, 0
      %s50 = sadd.s32 %s49, 1
      %s51 = scalar_select %p48, %s49, %s50
      %p54 = pneg %p48
      %p55 = scmp.eq.s32.totalorder %s18, 3
      %p56 = por %p54, %p55
      %p57 = scmp.ne.s32.totalorder %s49, %s52
      %p58 = scmp.eq.s32.totalorder %s18, 0
      %p59 = por %p57, %p58
      %p60 = scmp.ne.s32.totalorder %s49, %s52
      %p61 = scmp.eq.s32.totalorder %s23, 3
      %p62 = por %p60, %p61
      %p63 = scmp.ne.s32.totalorder %s52, %s53
      %p64 = scmp.eq.s32.totalorder %s23, 0
      %p65 = por %p63, %p64
      %p66 = scmp.ne.s32.totalorder %s52, %s53
      %p67 = scmp.eq.s32.totalorder %s24, 3
      %p68 = por %p66, %p67
      %p70 = scmp.ne.s32.totalorder %s53, %s69
      %p71 = scmp.eq.s32.totalorder %s24, 0
      %p72 = por %p70, %p71
      %s73 = ssub.s32 %s26, %s40
      %s74 = ssub.s32 %s27, %s36
      %s75 = sor.u32 %s73, %s74
      %p76 = scmp.eq.s32.totalorder %s75, 0
      %s78 = sadd.s32 %s77, 1
      %s79 = scalar_select %p76, %s77, %s78
      %p82 = pneg %p76
      %p83 = scmp.eq.s32.totalorder %s18, 3
      %p84 = por %p82, %p83
      %p85 = scmp.ne.s32.totalorder %s77, %s80
      %p86 = scmp.eq.s32.totalorder %s18, 0
      %p87 = por %p85, %p86
      %p88 = scmp.ne.s32.totalorder %s77, %s80
      %p89 = scmp.eq.s32.totalorder %s23, 3
      %p90 = por %p88, %p89
      %p91 = scmp.ne.s32.totalorder %s80, %s81
      %p92 = scmp.eq.s32.totalorder %s23, 0
      %p93 = por %p91, %p92
      %p94 = scmp.ne.s32.totalorder %s80, %s81
      %p95 = scmp.eq.s32.totalorder %s24, 3
      %p96 = por %p94, %p95
      %p98 = scmp.ne.s32.totalorder %s81, %s97
      %p99 = scmp.eq.s32.totalorder %s24, 0
      %p100 = por %p98, %p99
      %s101 = ssub.s32 %s26, %s40
      %p102 = scmp.eq.s32.totalorder %s101, 0
      %s104 = sadd.s32 %s103, 1
      %s105 = scalar_select %p102, %s103, %s104
      %p108 = pneg %p102
      %p109 = scmp.eq.s32.totalorder %s18, 3
      %p110 = por %p108, %p109
      %p111 = scmp.ne.s32.totalorder %s103, %s106
      %p112 = scmp.eq.s32.totalorder %s18, 0
      %p113 = por %p111, %p112
      %p114 = scmp.ne.s32.totalorder %s103, %s106
      %p115 = scmp.eq.s32.totalorder %s23, 3
      %p116 = por %p114, %p115
      %p117 = scmp.ne.s32.totalorder %s106, %s107
      %p118 = scmp.eq.s32.totalorder %s23, 0
      %p119 = por %p117, %p118
      %p120 = scmp.ne.s32.totalorder %s106, %s107
      %p121 = scmp.eq.s32.totalorder %s24, 3
      %p122 = por %p120, %p121
      %p124 = scmp.ne.s32.totalorder %s107, %s123
      %p125 = scmp.eq.s32.totalorder %s24, 0
      %p126 = por %p124, %p125
      %s127 = ssub.s32 %s25, %s44
      %s128 = ssub.s32 %s26, %s40
      %s129 = sor.u32 %s127, %s128
      %p130 = scmp.eq.s32.totalorder %s129, 0
      %s132 = sadd.s32 %s131, 1
      %s133 = scalar_select %p130, %s131, %s132
      %p136 = pneg %p130
      %p137 = scmp.eq.s32.totalorder %s18, 3
      %p138 = por %p136, %p137
      %p139 = scmp.ne.s32.totalorder %s131, %s134
      %p140 = scmp.eq.s32.totalorder %s18, 0
      %p141 = por %p139, %p140
      %p142 = scmp.ne.s32.totalorder %s131, %s134
      %p143 = scmp.eq.s32.totalorder %s23, 3
      %p144 = por %p142, %p143
      %p145 = scmp.ne.s32.totalorder %s134, %s135
      %p146 = scmp.eq.s32.totalorder %s23, 0
      %p147 = por %p145, %p146
      %p148 = scmp.ne.s32.totalorder %s134, %s135
      %p149 = scmp.eq.s32.totalorder %s24, 3
      %p150 = por %p148, %p149
      %p152 = scmp.ne.s32.totalorder %s135, %s151
      %p153 = scmp.eq.s32.totalorder %s24, 0
      %p154 = por %p152, %p153
      %p155 = scmp.le.s32.totalorder 1, %s18
      %p156 = scmp.lt.s32.totalorder %s18, 5
      %p157 = pnand %p155, %p156
      %p158 = pneg %p157
      // Predicated region
      $region9: #{tpu_custom_call.1} parent=5 // pred_check
        _
      $region10: #{tpu_custom_call.1} parent=5 // pred_check_branch
        %160 = sbr.rel (%p157) target = $region12
      $region11: #{tpu_custom_call.1} parent=5 // pred_region
        %s161 = ssub.s32 %s18, 1
      $region12: #{tpu_custom_call.1} parent=5 // pred_fallthru
        _
      %p162 = scmp.lt.s32.totalorder %s18, 4
      // Predicated region
      $region13: #{tpu_custom_call.1} parent=5 // pred_check
        %p163 = pneg %p162
      $region14: #{tpu_custom_call.1} parent=5 // pred_check_branch
        %165 = sbr.rel (%p163) target = $region16
      $region15: #{tpu_custom_call.1} parent=5 // pred_region
        // Predicated region
        $region17: #{tpu_custom_call.1} parent=15 // pred_check
          %p166 = pneg %p59
        $region18: #{tpu_custom_call.1} parent=15 // pred_check_branch
          %168 = sbr.rel (%p166) target = $region20
        $region19: #{tpu_custom_call.1} parent=15 // pred_region
          %s169 = sand.u32 %s49, 1
          %s170 = scalar_lea.sflag [#allocation4], %s169
          %s171 = sand.u32 %s49, 1
          %s172 = smul.addr %s171, 128
          %s173 = scalar_lea.vmem [#allocation3], %s172
          %s174 = smul.u32 8, %s25
          %s175 = smul.u32 2, %s27
          %s177 = ssub.s32 2048, 2048
          %178 = vsyncadd %s170, %s177
          %s179 = smul.addr %s174, 4
          %s180 = sadd.s32 %s175, %s179
          %s181 = smul.addr %s180, 128
          %s182 = scalar_lea.hbm %s0, %s181
          %s183 = sshll.u32 %s173, 4
          %s184 = int_to_ptr.vmem [resolvable:$true] %s183
          %189 = dma.hbm_to_vmem [thread:$0]  %s182, 2048, %s184, %s170, 512, 256, 16
        $region20: #{tpu_custom_call.1} parent=15 // pred_fallthru
          _
        // Predicated region
        $region21: #{tpu_custom_call.1} parent=15 // pred_check
          %p190 = pneg %p87
        $region22: #{tpu_custom_call.1} parent=15 // pred_check_branch
          %192 = sbr.rel (%p190) target = $region24
        $region23: #{tpu_custom_call.1} parent=15 // pred_region
          %s193 = sand.u32 %s77, 1
          %s194 = scalar_lea.sflag [#allocation7], %s193
          %s195 = sand.u32 %s77, 1
          %s196 = smul.addr %s195, 512
          %s197 = scalar_lea.vmem [#allocation6], %s196
          %s198 = smul.u32 32, %s26
          %s199 = smul.u32 2, %s27
          %s201 = ssub.s32 8192, 8192
          %202 = vsyncadd %s194, %s201
          %s203 = smul.addr %s198, 4
          %s204 = sadd.s32 %s199, %s203
          %s205 = smul.addr %s204, 128
          %s206 = scalar_lea.hbm %s1, %s205
          %s207 = sshll.u32 %s197, 4
          %s208 = int_to_ptr.vmem [resolvable:$true] %s207
          %213 = dma.hbm_to_vmem [thread:$0]  %s206, 8192, %s208, %s194, 512, 256, 16
        $region24: #{tpu_custom_call.1} parent=15 // pred_fallthru
          _
        // Predicated region
        $region25: #{tpu_custom_call.1} parent=15 // pred_check
          %p214 = pneg %p113
        $region26: #{tpu_custom_call.1} parent=15 // pred_check_branch
          %216 = sbr.rel (%p214) target = $region28
        $region27: #{tpu_custom_call.1} parent=15 // pred_region
          %s217 = smul.u32 2, %s26
          %p218 = scmp.lt.s32.totalorder %s217, 3
          %s219 = scalar_select %p218, %s217, 3
          %s220 = scalar_lea.vmem %s2, %s219
          %s221 = smul.u32 2, %s26
        $region28: #{tpu_custom_call.1} parent=15 // pred_fallthru
          _
      $region16: #{tpu_custom_call.1} parent=5 // pred_fallthru
        _
      %p222 = scmp.le.s32.totalorder 1, %s18
      %p223 = scmp.lt.s32.totalorder %s18, 5
      %p224 = pnand %p222, %p223
      %p225 = pneg %p224
      // Predicated region
      $region29: #{tpu_custom_call.1} parent=5 // pred_check
        _
      $region30: #{tpu_custom_call.1} parent=5 // pred_check_branch
        %227 = sbr.rel (%p224) target = $region32
      $region31: #{tpu_custom_call.1} parent=5 // pred_region
        %s228 = ssub.s32 %s18, 1
        %s229 = sand.u32 %s52, 1
        %s230 = scalar_lea.sflag [#allocation4], %s229
        %s231 = sand.u32 %s52, 1
        %s232 = smul.addr %s231, 128
        %s233 = scalar_lea.vmem [#allocation3], %s232
        // Predicated region
        $region33: #{tpu_custom_call.1} parent=31 // pred_check
          %p234 = pneg %p65
        $region34: #{tpu_custom_call.1} parent=31 // pred_check_branch
          %236 = sbr.rel (%p234) target = $region36
        $region35: #{tpu_custom_call.1} parent=31 // pred_region
          %237 = dma.done %s230, 2048
        $region36: #{tpu_custom_call.1} parent=31 // pred_fallthru
          _
        %s238 = sand.u32 %s80, 1
        %s239 = scalar_lea.sflag [#allocation7], %s238
        %s240 = sand.u32 %s80, 1
        %s241 = smul.addr %s240, 512
        %s242 = scalar_lea.vmem [#allocation6], %s241
        // Predicated region
        $region37: #{tpu_custom_call.1} parent=31 // pred_check
          %p243 = pneg %p93
        $region38: #{tpu_custom_call.1} parent=31 // pred_check_branch
          %245 = sbr.rel (%p243) target = $region40
        $region39: #{tpu_custom_call.1} parent=31 // pred_region
          %246 = dma.done %s239, 8192
        $region40: #{tpu_custom_call.1} parent=31 // pred_fallthru
          _
        %s247 = sand.u32 %s52, 1
        %s248 = scalar_lea.sflag [#allocation4], %s247
        %s249 = sand.u32 %s52, 1
        %s250 = smul.addr %s249, 128
        %s251 = scalar_lea.vmem [#allocation3], %s250
        %p252 = pneg %p65
        %p253 = pneg %p62
        %s254 = sand.u32 %s80, 1
        %s255 = scalar_lea.sflag [#allocation7], %s254
        %s256 = sand.u32 %s80, 1
        %s257 = smul.addr %s256, 512
        %s258 = scalar_lea.vmem [#allocation6], %s257
        %p259 = pneg %p93
        %p260 = pneg %p90
        %s261 = smul.u32 2, %s29
        %p262 = scmp.lt.s32.totalorder %s261, 3
        %s263 = scalar_select %p262, %s261, 3
        %s264 = scalar_lea.vmem %s2, %s263
        %p265 = pneg %p119
        %p266 = pneg %p116
        %p267 = pneg %p147
        %p268 = pneg %p144
        %s269 = sand.u32 %s134, 1
        %s270 = scalar_lea.sflag [#allocation5], %s269
        %s271 = sand.u32 %s134, 1
        %s272 = smul.addr %s271, 128
        %s273 = scalar_lea.vmem [#allocation8], %s272
        %s274 = smul.u32 8, %s28
        %s275 = smul.u32 2, %s30
        %s276 = smul.u32 32, %s29
        %s277 = smul.u32 2, %s30
        %s278 = smul.u32 2, %s29
        %p279 = scmp.lt.s32.totalorder %s278, 3
        %s280 = scalar_select %p279, %s278, 3
        %s281 = scalar_lea.vmem %s2, %s280
        %s282 = smul.u32 2, %s29
        %s283 = smul.u32 8, %s28
        %s284 = smul.u32 2, %s29
        %p285 = scmp.eq.s32.totalorder %s30, 0
        // Predicated region
        $region41: #{tpu_custom_call.1} parent=31 // pred_check
          %p286 = pneg %p285
        $region42: #{tpu_custom_call.1} parent=31 // pred_check_branch
          %288 = sbr.rel (%p286) target = $region44
        $region43: #{tpu_custom_call.1} parent=31 // pred_region
          %289 = vst [vmem:[#allocation2] sm:$0xff] 0.0
          %290 = vst [vmem:[#allocation2 + $0x8] sm:$0xff] 0.0
          %291 = vst [vmem:[#allocation2 + $0x10] sm:$0xff] 0.0
          %292 = vst [vmem:[#allocation2 + $0x18] sm:$0xff] 0.0
          %293 = vst [vmem:[#allocation2 + $0x20] sm:$0xff] 0.0
          %294 = vst [vmem:[#allocation2 + $0x28] sm:$0xff] 0.0
          %295 = vst [vmem:[#allocation2 + $0x30] sm:$0xff] 0.0
          %296 = vst [vmem:[#allocation2 + $0x38] sm:$0xff] 0.0
          %297 = vst [vmem:[#allocation2 + $0x40] sm:$0xff] 0.0
          %298 = vst [vmem:[#allocation2 + $0x48] sm:$0xff] 0.0
          %299 = vst [vmem:[#allocation2 + $0x50] sm:$0xff] 0.0
          %300 = vst [vmem:[#allocation2 + $0x58] sm:$0xff] 0.0
          %301 = vst [vmem:[#allocation2 + $0x60] sm:$0xff] 0.0
          %302 = vst [vmem:[#allocation2 + $0x68] sm:$0xff] 0.0
          %303 = vst [vmem:[#allocation2 + $0x70] sm:$0xff] 0.0
          %304 = vst [vmem:[#allocation2 + $0x78] sm:$0xff] 0.0
        $region44: #{tpu_custom_call.1} parent=31 // pred_fallthru
          _
        %v305 = vld [vmem:[#allocation2] sm:$0xff]
        %v306 = vld [vmem:[#allocation2 + $0x8] sm:$0xff]
        %v307 = vld [vmem:[#allocation2 + $0x10] sm:$0xff]
        %v308 = vld [vmem:[#allocation2 + $0x18] sm:$0xff]
        %v309 = vld [vmem:[#allocation2 + $0x20] sm:$0xff]
        %v310 = vld [vmem:[#allocation2 + $0x28] sm:$0xff]
        %v311 = vld [vmem:[#allocation2 + $0x30] sm:$0xff]
        %v312 = vld [vmem:[#allocation2 + $0x38] sm:$0xff]
        %v313 = vld [vmem:[#allocation2 + $0x40] sm:$0xff]
        %v314 = vld [vmem:[#allocation2 + $0x48] sm:$0xff]
        %v315 = vld [vmem:[#allocation2 + $0x50] sm:$0xff]
        %v316 = vld [vmem:[#allocation2 + $0x58] sm:$0xff]
        %v317 = vld [vmem:[#allocation2 + $0x60] sm:$0xff]
        %v318 = vld [vmem:[#allocation2 + $0x68] sm:$0xff]
        %v319 = vld [vmem:[#allocation2 + $0x70] sm:$0xff]
        %v320 = vld [vmem:[#allocation2 + $0x78] sm:$0xff]
        %v321 = vld [vmem:[%s233] sm:$0xff]
        %v322 = vld [vmem:[%s233 + $0x8] sm:$0xff]
        %v323 = vld [vmem:[%s233 + $0x10] sm:$0xff]
        %v324 = vld [vmem:[%s233 + $0x18] sm:$0xff]
        %v325 = vld [vmem:[%s233 + $0x20] sm:$0xff]
        %v326 = vld [vmem:[%s233 + $0x28] sm:$0xff]
        %v327 = vld [vmem:[%s233 + $0x30] sm:$0xff]
        %v328 = vld [vmem:[%s233 + $0x38] sm:$0xff]
        %v329 = vld [vmem:[%s233 + $0x40] sm:$0xff]
        %v330 = vld [vmem:[%s233 + $0x48] sm:$0xff]
        %v331 = vld [vmem:[%s233 + $0x50] sm:$0xff]
        %v332 = vld [vmem:[%s233 + $0x58] sm:$0xff]
        %v333 = vld [vmem:[%s233 + $0x60] sm:$0xff]
        %v334 = vld [vmem:[%s233 + $0x68] sm:$0xff]
        %v335 = vld [vmem:[%s233 + $0x70] sm:$0xff]
        %v336 = vld [vmem:[%s233 + $0x78] sm:$0xff]
        %v337 = vld [vmem:[%s242] sm:$0xff]
        %v338 = vld [vmem:[%s242 + $0x8] sm:$0xff]
        %v339 = vld [vmem:[%s242 + $0x10] sm:$0xff]
        %v340 = vld [vmem:[%s242 + $0x18] sm:$0xff]
        %v341 = vld [vmem:[%s242 + $0x20] sm:$0xff]
        %v342 = vld [vmem:[%s242 + $0x28] sm:$0xff]
        %v343 = vld [vmem:[%s242 + $0x30] sm:$0xff]
        %v344 = vld [vmem:[%s242 + $0x38] sm:$0xff]
        %v345 = vld [vmem:[%s242 + $0x40] sm:$0xff]
        %v346 = vld [vmem:[%s242 + $0x48] sm:$0xff]
        %v347 = vld [vmem:[%s242 + $0x50] sm:$0xff]
        %v348 = vld [vmem:[%s242 + $0x58] sm:$0xff]
        %v349 = vld [vmem:[%s242 + $0x60] sm:$0xff]
        %v350 = vld [vmem:[%s242 + $0x68] sm:$0xff]
        %v351 = vld [vmem:[%s242 + $0x70] sm:$0xff]
        %v352 = vld [vmem:[%s242 + $0x78] sm:$0xff]
        %v353 = vld [vmem:[%s242 + $0x80] sm:$0xff]
        %v354 = vld [vmem:[%s242 + $0x88] sm:$0xff]
        %v355 = vld [vmem:[%s242 + $0x90] sm:$0xff]
        %v356 = vld [vmem:[%s242 + $0x98] sm:$0xff]
        %v357 = vld [vmem:[%s242 + $0xa0] sm:$0xff]
        %v358 = vld [vmem:[%s242 + $0xa8] sm:$0xff]
        %v359 = vld [vmem:[%s242 + $0xb0] sm:$0xff]
        %v360 = vld [vmem:[%s242 + $0xb8] sm:$0xff]
        %v361 = vld [vmem:[%s242 + $0xc0] sm:$0xff]
        %v362 = vld [vmem:[%s242 + $0xc8] sm:$0xff]
        %v363 = vld [vmem:[%s242 + $0xd0] sm:$0xff]
        %v364 = vld [vmem:[%s242 + $0xd8] sm:$0xff]
        %v365 = vld [vmem:[%s242 + $0xe0] sm:$0xff]
        %v366 = vld [vmem:[%s242 + $0xe8] sm:$0xff]
        %v367 = vld [vmem:[%s242 + $0xf0] sm:$0xff]
        %v368 = vld [vmem:[%s242 + $0xf8] sm:$0xff]
        %v369 = vld [vmem:[%s242 + $0x100] sm:$0xff]
        %v370 = vld [vmem:[%s242 + $0x108] sm:$0xff]
        %v371 = vld [vmem:[%s242 + $0x110] sm:$0xff]
        %v372 = vld [vmem:[%s242 + $0x118] sm:$0xff]
        %v373 = vld [vmem:[%s242 + $0x120] sm:$0xff]
        %v374 = vld [vmem:[%s242 + $0x128] sm:$0xff]
        %v375 = vld [vmem:[%s242 + $0x130] sm:$0xff]
        %v376 = vld [vmem:[%s242 + $0x138] sm:$0xff]
        %v377 = vld [vmem:[%s242 + $0x140] sm:$0xff]
        %v378 = vld [vmem:[%s242 + $0x148] sm:$0xff]
        %v379 = vld [vmem:[%s242 + $0x150] sm:$0xff]
        %v380 = vld [vmem:[%s242 + $0x158] sm:$0xff]
        %v381 = vld [vmem:[%s242 + $0x160] sm:$0xff]
        %v382 = vld [vmem:[%s242 + $0x168] sm:$0xff]
        %v383 = vld [vmem:[%s242 + $0x170] sm:$0xff]
        %v384 = vld [vmem:[%s242 + $0x178] sm:$0xff]
        %v385 = vld [vmem:[%s242 + $0x180] sm:$0xff]
        %v386 = vld [vmem:[%s242 + $0x188] sm:$0xff]
        %v387 = vld [vmem:[%s242 + $0x190] sm:$0xff]
        %v388 = vld [vmem:[%s242 + $0x198] sm:$0xff]
        %v389 = vld [vmem:[%s242 + $0x1a0] sm:$0xff]
        %v390 = vld [vmem:[%s242 + $0x1a8] sm:$0xff]
        %v391 = vld [vmem:[%s242 + $0x1b0] sm:$0xff]
        %v392 = vld [vmem:[%s242 + $0x1b8] sm:$0xff]
        %v393 = vld [vmem:[%s242 + $0x1c0] sm:$0xff]
        %v394 = vld [vmem:[%s242 + $0x1c8] sm:$0xff]
        %v395 = vld [vmem:[%s242 + $0x1d0] sm:$0xff]
        %v396 = vld [vmem:[%s242 + $0x1d8] sm:$0xff]
        %v397 = vld [vmem:[%s242 + $0x1e0] sm:$0xff]
        %v398 = vld [vmem:[%s242 + $0x1e8] sm:$0xff]
        %v399 = vld [vmem:[%s242 + $0x1f0] sm:$0xff]
        %v400 = vld [vmem:[%s242 + $0x1f8] sm:$0xff]
        %401 = vmatprep.subr.mxu0 %v338
        %402 = vmatpush1.xpose.msra.mxu0 %v337
        %403 = vmatprep.subr.mxu0 %v340
        %404 = vmatpush1.xpose.msra.mxu0 %v339
        %405 = vmatprep.subr.mxu0 %v342
        %406 = vmatpush1.xpose.msra.mxu0 %v341
        %407 = vmatprep.subr.mxu0 %v344
        %408 = vmatpush1.xpose.msra.mxu0 %v343
        %409 = vmatprep.subr.mxu0 %v346
        %410 = vmatpush1.xpose.msra.mxu0 %v345
        %411 = vmatprep.subr.mxu0 %v348
        %412 = vmatpush1.xpose.msra.mxu0 %v347
        %413 = vmatprep.subr.mxu0 %v350
        %414 = vmatpush1.xpose.msra.mxu0 %v349
        %415 = vmatprep.subr.mxu0 %v352
        %416 = vmatpush1.xpose.msra.mxu0 %v351
        %417 = vmatprep.subr.mxu0 %v354
        %418 = vmatpush1.xpose.msra.mxu0 %v353
        %419 = vmatprep.subr.mxu0 %v356
        %420 = vmatpush1.xpose.msra.mxu0 %v355
        %421 = vmatprep.subr.mxu0 %v358
        %422 = vmatpush1.xpose.msra.mxu0 %v357
        %423 = vmatprep.subr.mxu0 %v360
        %424 = vmatpush1.xpose.msra.mxu0 %v359
        %425 = vmatprep.subr.mxu0 %v362
        %426 = vmatpush1.xpose.msra.mxu0 %v361
        %427 = vmatprep.subr.mxu0 %v364
        %428 = vmatpush1.xpose.msra.mxu0 %v363
        %429 = vmatprep.subr.mxu0 %v366
        %430 = vmatpush1.xpose.msra.mxu0 %v365
        %431 = vmatprep.subr.mxu0 %v368
        %432 = vmatpush1.xpose.msra.mxu0 %v367
        %433 = vmatprep.subr.mxu0 %v370
        %434 = vmatpush1.xpose.msra.mxu0 %v369
        %435 = vmatprep.subr.mxu0 %v372
        %436 = vmatpush1.xpose.msra.mxu0 %v371
        %437 = vmatprep.subr.mxu0 %v374
        %438 = vmatpush1.xpose.msra.mxu0 %v373
        %439 = vmatprep.subr.mxu0 %v376
        %440 = vmatpush1.xpose.msra.mxu0 %v375
        %441 = vmatprep.subr.mxu0 %v378
        %442 = vmatpush1.xpose.msra.mxu0 %v377
        %443 = vmatprep.subr.mxu0 %v380
        %444 = vmatpush1.xpose.msra.mxu0 %v379
        %445 = vmatprep.subr.mxu0 %v382
        %446 = vmatpush1.xpose.msra.mxu0 %v381
        %447 = vmatprep.subr.mxu0 %v384
        %448 = vmatpush1.xpose.msra.mxu0 %v383
        %449 = vmatprep.subr.mxu0 %v386
        %450 = vmatpush1.xpose.msra.mxu0 %v385
        %451 = vmatprep.subr.mxu0 %v388
        %452 = vmatpush1.xpose.msra.mxu0 %v387
        %453 = vmatprep.subr.mxu0 %v390
        %454 = vmatpush1.xpose.msra.mxu0 %v389
        %455 = vmatprep.subr.mxu0 %v392
        %456 = vmatpush1.xpose.msra.mxu0 %v391
        %457 = vmatprep.subr.mxu0 %v394
        %458 = vmatpush1.xpose.msra.mxu0 %v393
        %459 = vmatprep.subr.mxu0 %v396
        %460 = vmatpush1.xpose.msra.mxu0 %v395
        %461 = vmatprep.subr.mxu0 %v398
        %462 = vmatpush1.xpose.msra.mxu0 %v397
        %463 = vmatprep.subr.mxu0 %v400
        %464 = vmatpush1.xpose.msra.mxu0 %v399
        %465 = vmatprep.mubr.f32.mxu0 %v322
        %466 = vmatmul.mubr.f32.gmra.mrb[0].mxu0 %v321
        %v467 = vpop.f32.mrb[0].mxu0
        %v468 = vadd.f32 0.0, %v467
        %v469 = vpop.f32.mrb[0].mxu0
        %v470 = vadd.f32 0.0, %v469
        %471 = vmatprep.mubr.f32.mxu0 %v324
        %472 = vmatmul.mubr.f32.gmra.mrb[0].mxu0 %v323
        %v473 = vpop.f32.mrb[0].mxu0
        %v474 = vadd.f32 0.0, %v473
        %v475 = vpop.f32.mrb[0].mxu0
        %v476 = vadd.f32 0.0, %v475
        %477 = vmatprep.mubr.f32.mxu0 %v326
        %478 = vmatmul.mubr.f32.gmra.mrb[0].mxu0 %v325
        %v479 = vpop.f32.mrb[0].mxu0
        %v480 = vadd.f32 0.0, %v479
        %v481 = vpop.f32.mrb[0].mxu0
        %v482 = vadd.f32 0.0, %v481
        %483 = vmatprep.mubr.f32.mxu0 %v328
        %484 = vmatmul.mubr.f32.gmra.mrb[0].mxu0 %v327
        %v485 = vpop.f32.mrb[0].mxu0
        %v486 = vadd.f32 0.0, %v485
        %v487 = vpop.f32.mrb[0].mxu0
        %v488 = vadd.f32 0.0, %v487
        %489 = vmatprep.mubr.f32.mxu0 %v330
        %490 = vmatmul.mubr.f32.gmra.mrb[0].mxu0 %v329
        %v491 = vpop.f32.mrb[0].mxu0
        %v492 = vadd.f32 0.0, %v491
        %v493 = vpop.f32.mrb[0].mxu0
        %v494 = vadd.f32 0.0, %v493
        %495 = vmatprep.mubr.f32.mxu0 %v332
        %496 = vmatmul.mubr.f32.gmra.mrb[0].mxu0 %v331
        %v497 = vpop.f32.mrb[0].mxu0
        %v498 = vadd.f32 0.0, %v497
        %v499 = vpop.f32.mrb[0].mxu0
        %v500 = vadd.f32 0.0, %v499
        %501 = vmatprep.mubr.f32.mxu0 %v334
        %502 = vmatmul.mubr.f32.gmra.mrb[0].mxu0 %v333
        %v503 = vpop.f32.mrb[0].mxu0
        %v504 = vadd.f32 0.0, %v503
        %v505 = vpop.f32.mrb[0].mxu0
        %v506 = vadd.f32 0.0, %v505
        %507 = vmatprep.mubr.f32.mxu0 %v336
        %508 = vmatmul.mubr.f32.gmra.mrb[0].mxu0 %v335
        %v509 = vpop.f32.mrb[0].mxu0
        %v510 = vadd.f32 0.0, %v509
        %v511 = vpop.f32.mrb[0].mxu0
        %v512 = vadd.f32 0.0, %v511
        %513 = vdwg.mxu0
        %v514 = vadd.f32 %v305, %v468
        %v515 = vadd.f32 %v306, %v470
        %v516 = vadd.f32 %v307, %v474
        %v517 = vadd.f32 %v308, %v476
        %v518 = vadd.f32 %v309, %v480
        %v519 = vadd.f32 %v310, %v482
        %v520 = vadd.f32 %v311, %v486
        %v521 = vadd.f32 %v312, %v488
        %v522 = vadd.f32 %v313, %v492
        %v523 = vadd.f32 %v314, %v494
        %v524 = vadd.f32 %v315, %v498
        %v525 = vadd.f32 %v316, %v500
        %v526 = vadd.f32 %v317, %v504
        %v527 = vadd.f32 %v318, %v506
        %v528 = vadd.f32 %v319, %v510
        %v529 = vadd.f32 %v320, %v512
        %530 = vst [vmem:[#allocation2] sm:$0xff] %v514
        %531 = vst [vmem:[#allocation2 + $0x8] sm:$0xff] %v515
        %532 = vst [vmem:[#allocation2 + $0x10] sm:$0xff] %v516
        %533 = vst [vmem:[#allocation2 + $0x18] sm:$0xff] %v517
        %534 = vst [vmem:[#allocation2 + $0x20] sm:$0xff] %v518
        %535 = vst [vmem:[#allocation2 + $0x28] sm:$0xff] %v519
        %536 = vst [vmem:[#allocation2 + $0x30] sm:$0xff] %v520
        %537 = vst [vmem:[#allocation2 + $0x38] sm:$0xff] %v521
        %538 = vst [vmem:[#allocation2 + $0x40] sm:$0xff] %v522
        %539 = vst [vmem:[#allocation2 + $0x48] sm:$0xff] %v523
        %540 = vst [vmem:[#allocation2 + $0x50] sm:$0xff] %v524
        %541 = vst [vmem:[#allocation2 + $0x58] sm:$0xff] %v525
        %542 = vst [vmem:[#allocation2 + $0x60] sm:$0xff] %v526
        %543 = vst [vmem:[#allocation2 + $0x68] sm:$0xff] %v527
        %544 = vst [vmem:[#allocation2 + $0x70] sm:$0xff] %v528
        %545 = vst [vmem:[#allocation2 + $0x78] sm:$0xff] %v529
        %p546 = scmp.eq.s32.totalorder %s30, 1
        // Predicated region
        $region45: #{tpu_custom_call.1} parent=31 // pred_check
          %p547 = pneg %p546
        $region46: #{tpu_custom_call.1} parent=31 // pred_check_branch
          %549 = sbr.rel (%p547) target = $region48
        $region47: #{tpu_custom_call.1} parent=31 // pred_region
          %v550 = vld [vmem:[#allocation2] sm:$0xff]
          %v551 = vld [vmem:[#allocation2 + $0x8] sm:$0xff]
          %v552 = vld [vmem:[#allocation2 + $0x10] sm:$0xff]
          %v553 = vld [vmem:[#allocation2 + $0x18] sm:$0xff]
          %v554 = vld [vmem:[#allocation2 + $0x20] sm:$0xff]
          %v555 = vld [vmem:[#allocation2 + $0x28] sm:$0xff]
          %v556 = vld [vmem:[#allocation2 + $0x30] sm:$0xff]
          %v557 = vld [vmem:[#allocation2 + $0x38] sm:$0xff]
          %v558 = vld [vmem:[#allocation2 + $0x40] sm:$0xff]
          %v559 = vld [vmem:[#allocation2 + $0x48] sm:$0xff]
          %v560 = vld [vmem:[#allocation2 + $0x50] sm:$0xff]
          %v561 = vld [vmem:[#allocation2 + $0x58] sm:$0xff]
          %v562 = vld [vmem:[#allocation2 + $0x60] sm:$0xff]
          %v563 = vld [vmem:[#allocation2 + $0x68] sm:$0xff]
          %v564 = vld [vmem:[#allocation2 + $0x70] sm:$0xff]
          %v565 = vld [vmem:[#allocation2 + $0x78] sm:$0xff]
          %v566 = vld [vmem:[%s281] sm:$0x3]
          %v568 = vlaneseq
          %v569 = vshrl.u32 %v568, 7
          %v570 = vsub.s32 0, %v569
          %v571 = vrot.slane %v566, %v570
          %v572 = vlaneseq
          %v573 = vshrl.u32 %v572, 7
          %v574 = vsub.s32 1, %v573
          %v575 = vrot.slane %v566, %v574
          %v578 = vadd.f32 %v550, %v571
          %v579 = vadd.f32 %v551, %v575
          %v580 = vadd.f32 %v552, %v571
          %v581 = vadd.f32 %v553, %v575
          %v582 = vadd.f32 %v554, %v571
          %v583 = vadd.f32 %v555, %v575
          %v584 = vadd.f32 %v556, %v571
          %v585 = vadd.f32 %v557, %v575
          %v586 = vadd.f32 %v558, %v571
          %v587 = vadd.f32 %v559, %v575
          %v588 = vadd.f32 %v560, %v571
          %v589 = vadd.f32 %v561, %v575
          %v590 = vadd.f32 %v562, %v571
          %v591 = vadd.f32 %v563, %v575
          %v592 = vadd.f32 %v564, %v571
          %v593 = vadd.f32 %v565, %v575
          %v594 = vmax.f32 %v578, 0.0
          %v595 = vmax.f32 %v579, 0.0
          %v596 = vmax.f32 %v580, 0.0
          %v597 = vmax.f32 %v581, 0.0
          %v598 = vmax.f32 %v582, 0.0
          %v599 = vmax.f32 %v583, 0.0
          %v600 = vmax.f32 %v584, 0.0
          %v601 = vmax.f32 %v585, 0.0
          %v602 = vmax.f32 %v586, 0.0
          %v603 = vmax.f32 %v587, 0.0
          %v604 = vmax.f32 %v588, 0.0
          %v605 = vmax.f32 %v589, 0.0
          %v606 = vmax.f32 %v590, 0.0
          %v607 = vmax.f32 %v591, 0.0
          %v608 = vmax.f32 %v592, 0.0
          %v609 = vmax.f32 %v593, 0.0
          %610 = vst [vmem:[%s273] sm:$0xff] %v594
          %611 = vst [vmem:[%s273 + $0x8] sm:$0xff] %v595
          %612 = vst [vmem:[%s273 + $0x10] sm:$0xff] %v596
          %613 = vst [vmem:[%s273 + $0x18] sm:$0xff] %v597
          %614 = vst [vmem:[%s273 + $0x20] sm:$0xff] %v598
          %615 = vst [vmem:[%s273 + $0x28] sm:$0xff] %v599
          %616 = vst [vmem:[%s273 + $0x30] sm:$0xff] %v600
          %617 = vst [vmem:[%s273 + $0x38] sm:$0xff] %v601
          %618 = vst [vmem:[%s273 + $0x40] sm:$0xff] %v602
          %619 = vst [vmem:[%s273 + $0x48] sm:$0xff] %v603
          %620 = vst [vmem:[%s273 + $0x50] sm:$0xff] %v604
          %621 = vst [vmem:[%s273 + $0x58] sm:$0xff] %v605
          %622 = vst [vmem:[%s273 + $0x60] sm:$0xff] %v606
          %623 = vst [vmem:[%s273 + $0x68] sm:$0xff] %v607
          %624 = vst [vmem:[%s273 + $0x70] sm:$0xff] %v608
          %625 = vst [vmem:[%s273 + $0x78] sm:$0xff] %v609
        $region48: #{tpu_custom_call.1} parent=31 // pred_fallthru
          _
        %s626 = sand.u32 %s134, 1
        %s627 = scalar_lea.sflag [#allocation5], %s626
        %s628 = sand.u32 %s134, 1
        %s629 = smul.addr %s628, 128
        %s630 = scalar_lea.vmem [#allocation8], %s629
        // Predicated region
        $region49: #{tpu_custom_call.1} parent=31 // pred_check
          %p631 = pneg %p144
        $region50: #{tpu_custom_call.1} parent=31 // pred_check_branch
          %633 = sbr.rel (%p631) target = $region52
        $region51: #{tpu_custom_call.1} parent=31 // pred_region
          %s634 = smul.u32 8, %s28
          %s635 = smul.u32 2, %s29
          %s637 = ssub.s32 2048, 2048
          %638 = vsyncadd %s627, %s637
          %s639 = smul.addr %s634, 4
          %s640 = sadd.s32 %s635, %s639
          %s641 = smul.addr %s640, 128
          %s642 = scalar_lea.hbm %s3, %s641
          %s643 = sshll.u32 %s630, 4
          %s644 = int_to_ptr.vmem [resolvable:$true] %s643
          %649 = dma.vmem_to_hbm [thread:$0]  %s644, 2048, %s642, %s627, 256, 512, 16
        $region52: #{tpu_custom_call.1} parent=31 // pred_fallthru
          _
      $region32: #{tpu_custom_call.1} parent=5 // pred_fallthru
        _
      %p650 = scmp.le.s32.totalorder 2, %s18
      // Predicated region
      $region53: #{tpu_custom_call.1} parent=5 // pred_check
        %p651 = pneg %p650
      $region54: #{tpu_custom_call.1} parent=5 // pred_check_branch
        %653 = sbr.rel (%p651) target = $region56
      $region55: #{tpu_custom_call.1} parent=5 // pred_region
        %s654 = ssub.s32 %s18, 2
        // Predicated region
        $region57: #{tpu_custom_call.1} parent=55 // pred_check
          %p655 = pneg %p150
        $region58: #{tpu_custom_call.1} parent=55 // pred_check_branch
          %657 = sbr.rel (%p655) target = $region60
        $region59: #{tpu_custom_call.1} parent=55 // pred_region
          %s658 = sand.u32 %s135, 1
          %s659 = scalar_lea.sflag [#allocation5], %s658
          %s660 = sand.u32 %s135, 1
          %s661 = smul.addr %s660, 128
          %s662 = scalar_lea.vmem [#allocation8], %s661
          %663 = dma.done %s659, 2048
        $region60: #{tpu_custom_call.1} parent=55 // pred_fallthru
          _
      $region56: #{tpu_custom_call.1} parent=5 // pred_fallthru
        _
    $region6: #{tpu_custom_call.1} parent=1 // loop_footer
      %s22 = sadd.s32 1, %s18
    $region7: #{tpu_custom_call.1} parent=1 // loop_footer_branch
      %17 = sbr.rel target = $region3
    $region8: #{tpu_custom_call.1} parent=1 // loop_exit
      _
    %664 = vsyncpa [#allocation4], 1
    %s665 = scalar_lea.sflag [#allocation4], 1
    %666 = vsyncpa %s665, 1
    %667 = vsyncpa [#allocation7], 1
    %s668 = scalar_lea.sflag [#allocation7], 1
    %669 = vsyncpa %s668, 1
    %670 = vsyncpa [#allocation5], 1
    %s671 = scalar_lea.sflag [#allocation5], 1
    %672 = vsyncpa %s671, 1

</llo_original>
